<compile_context>
chip_gen: v5e
topology: v5e:2x2
jax: 0.10.0
libtpu: 0.0.40
codegen_flags: <defaults>
</compile_context>

<pallas_src>
import jax
import jax.numpy as jnp
from jax.experimental import pallas as pl
from jax.experimental.pallas import tpu as pltpu


_LANES = 1024           # lane-dense last dim (multiple of 128)
_MAX_TILE_ROWS = 1024   # (1024, 1024) f32 = 4 MiB per buffer


def _round_up(x, m):
    return ((x + m - 1) // m) * m


def _sublane_multiple(dtype):
    # 8 rows for 4-byte dtypes, 16 for 2-byte, 32 for 1-byte.
    itemsize = jnp.dtype(dtype).itemsize
    return max(8, 32 // max(1, itemsize))


def _affine_kernel(x_ref, o_ref):
    # Literal op sequence ((x + 5) - 2) * 3 / 4 ; `/ 4` == `* 0.25` exactly.
    x = x_ref[...].astype(jnp.float32)
    o_ref[...] = (((x + 5.0) - 2.0) * 3.0 * 0.25).astype(o_ref.dtype)


def _run_tiled(x2, out_dtype, tile_rows, lanes):
    rows = x2.shape[0]
    n_elems = rows * lanes
    in_bytes = n_elems * jnp.dtype(x2.dtype).itemsize
    out_bytes = n_elems * jnp.dtype(out_dtype).itemsize
    return pl.pallas_call(
        _affine_kernel,
        out_shape=jax.ShapeDtypeStruct((rows, lanes), out_dtype),
        grid=(pl.cdiv(rows, tile_rows),),
        in_specs=[pl.BlockSpec((tile_rows, lanes), lambda i: (i, 0))],
        out_specs=pl.BlockSpec((tile_rows, lanes), lambda i: (i, 0)),
        compiler_params=pltpu.CompilerParams(
            dimension_semantics=("parallel",),
            vmem_limit_bytes=32 * 1024 * 1024,
        ),
        cost_estimate=pl.CostEstimate(
            flops=4 * n_elems,
            bytes_accessed=in_bytes + out_bytes,
            transcendentals=0,
        ),
    )(x2)


def _run_tail(tail_flat, out_dtype):
    # Tail is < _LANES elements: pad just the tail to a 128 multiple (touches
    # <4 KiB), run a tiny un-gridded kernel, slice the result back.
    m = tail_flat.shape[0]
    pad = (-m) % 128
    if pad:
        tail_flat = jnp.pad(tail_flat, (0, pad))
    t2 = tail_flat.reshape(1, m + pad)
    out = pl.pallas_call(
        _affine_kernel,
        out_shape=jax.ShapeDtypeStruct(t2.shape, out_dtype),
    )(t2)
    return out.reshape(-1)[:m]


def pt_module_forward(x):
    """Applies ((x + 5) - 2) * 3 / 4 elementwise via Pallas TPU kernels."""
    orig_shape = x.shape
    in_dtype = x.dtype
    # PyTorch `/ 4` promotes integer inputs to floating point.
    out_dtype = in_dtype if jnp.issubdtype(in_dtype, jnp.floating) else jnp.float32

    flat = x.reshape(-1)
    n = flat.shape[0]
    if n == 0:
        return jnp.zeros(orig_shape, out_dtype)

    sublane = _sublane_multiple(in_dtype)
    n_aligned = (n // _LANES) * _LANES
    n_tail = n - n_aligned

    pieces = []
    if n_aligned:
        rows = n_aligned // _LANES
        # Largest tile up to _MAX_TILE_ROWS, rounded to the dtype sublane
        # multiple; for mid-sized inputs split into >=2 blocks so both v7x
        # TensorCores get work.
        tile_rows = min(_MAX_TILE_ROWS, _round_up(rows, sublane))
        if rows <= _MAX_TILE_ROWS and rows >= 2 * sublane:
            tile_rows = _round_up(pl.cdiv(rows, 2), sublane)
        prefix = flat if n_tail == 0 else flat[:n_aligned]
        x2 = prefix.reshape(rows, _LANES)
        pieces.append(_run_tiled(x2, out_dtype, tile_rows, _LANES).reshape(-1))
    if n_tail:
        pieces.append(_run_tail(flat[n_aligned:], out_dtype))

    out_flat = pieces[0] if len(pieces) == 1 else jnp.concatenate(pieces)
    return out_flat.reshape(orig_shape)


if __name__ == "__main__":
    key = jax.random.PRNGKey(0)
    # Small NCHW-style input consistent with a generic forward(x).
    x = jax.random.normal(key, (2, 4, 16, 16), dtype=jnp.float32)

    y = pt_module_forward(x)
    y = jax.block_until_ready(y)

    # Reference check against plain JAX.
    y_ref = ((x + 5.0) - 2.0) * 3.0 / 4.0
    assert y.shape == x.shape and y.dtype == x.dtype
    assert jnp.allclose(y, y_ref, atol=1e-6, rtol=1e-6)

    # Also exercise a non-1024-aligned size to cover the tail path.
    x_odd = jax.random.normal(jax.random.PRNGKey(1), (3, 5, 7), dtype=jnp.float32)
    y_odd = jax.block_until_ready(pt_module_forward(x_odd))
    y_odd_ref = ((x_odd + 5.0) - 2.0) * 3.0 / 4.0
    assert jnp.allclose(y_odd, y_odd_ref, atol=1e-6, rtol=1e-6)

    print("KERNEL_OK")
</pallas_src>

<mosaic_0001>
module attributes {stable_mosaic.version = 11 : i64} {
  func.func @_affine_kernel(%arg0: i32, %arg1: memref<8x1024xf32, #tpu.memory_space<vmem>>, %arg2: memref<8x1024xf32, #tpu.memory_space<vmem>>) attributes {dimension_semantics = [#tpu.dimension_semantics<parallel>], iteration_bounds = array<i64: 1>, scalar_prefetch = 0 : i64, scratch_operands = 0 : i64, tpu.core_type = #tpu.core_type<tc>, window_params = [{transform_indices = @transform_0, window_bounds = array<i64: 8, 1024>}, {transform_indices = @transform_1, window_bounds = array<i64: 8, 1024>}]} {
    %c0 = arith.constant 0 : index
    %c0_0 = arith.constant 0 : index
    %0 = vector.load %arg1[%c0, %c0_0] : memref<8x1024xf32, #tpu.memory_space<vmem>>, vector<8x1024xf32>
    %cst = arith.constant 5.000000e+00 : f32
    %1 = vector.broadcast %cst : f32 to vector<8x1024xf32>
    %2 = arith.addf %0, %1 : vector<8x1024xf32>
    %cst_1 = arith.constant 2.000000e+00 : f32
    %3 = vector.broadcast %cst_1 : f32 to vector<8x1024xf32>
    %4 = arith.subf %2, %3 : vector<8x1024xf32>
    %cst_2 = arith.constant 3.000000e+00 : f32
    %5 = vector.broadcast %cst_2 : f32 to vector<8x1024xf32>
    %6 = arith.mulf %4, %5 : vector<8x1024xf32>
    %cst_3 = arith.constant 2.500000e-01 : f32
    %7 = vector.broadcast %cst_3 : f32 to vector<8x1024xf32>
    %8 = arith.mulf %6, %7 : vector<8x1024xf32>
    %c0_4 = arith.constant 0 : index
    %c0_5 = arith.constant 0 : index
    %9 = vector.load %arg2[%c0_4, %c0_5] : memref<8x1024xf32, #tpu.memory_space<vmem>>, vector<8x1024xf32>
    tpu.vector_store %arg2[%c0_4, %c0_5], %8 {strides = array<i32>} : memref<8x1024xf32, #tpu.memory_space<vmem>>, vector<8x1024xf32>,
    return
  }
  func.func @transform_0(%arg0: i32) -> (i32, i32) {
    %c0_i32 = arith.constant 0 : i32
    %c0_i32_0 = arith.constant 0 : i32
    return %arg0, %c0_i32 : i32, i32
  }
  func.func @transform_1(%arg0: i32) -> (i32, i32) {
    %c0_i32 = arith.constant 0 : i32
    %c0_i32_0 = arith.constant 0 : i32
    return %arg0, %c0_i32 : i32, i32
  }
}

</mosaic_0001>

<llo_original>
// kernel: tpu_custom_call.1
$region0: #{tpu_custom_call.1}
  #allocation0 [shape = 'u32[]', space=smem, size = 0x4, offset = 0x4, fixed_abs, tag = 'smem constant byte address 0x4 - core index']
  #allocation1 [shape = 'u32[72,128]{1,0:T(1,128)}', space=vmem, size = 0x9000, scoped, tag = 'internal scratch']
  %s0 = inlined_call_operand.hbm [shape: f32[2,1024], index: 0, kind: input, shape index: {}]
  %s1 = inlined_call_operand.hbm [shape: f32[2,1024], index: 1, kind: output, shape index: {}]
  %s2 = sld [smem:[#allocation0]]
  $region18: #{tpu_custom_call.1} parent=0
    _
  %s4 = ssub.s32 1, %s2
  %s5 = scalar_select 0, %s4, %s2
  $region1: #{tpu_custom_call.1} parent=0
    #allocation2 [shape = 'u8[32768]{0}', space=vmem, size = 0x8000, scoped, tag = 'input window, operand 0, single buffered']
    #allocation3 [shape = 's32[1]{0}', space=sflag, size = 0x4, scoped, tag = 'scoped memory for tpu_custom_call.1']
    #allocation4 [shape = 's32[1]{0}', space=sflag, size = 0x4, scoped, tag = 'scoped memory for tpu_custom_call.1']
    #allocation5 [shape = 'u8[32768]{0}', space=vmem, size = 0x8000, scoped, tag = 'output window, operand 0, single buffered']
    %6 = vsyncpa [#allocation3], 0
    %7 = vsyncpa [#allocation4], 0
    // Predicated region
    $region2: #{tpu_custom_call.1} parent=1 // pred_check
      _
    $region3: #{tpu_custom_call.1} parent=1 // pred_check_branch
      %9 = sbr.rel (0) target = $region5
    $region4: #{tpu_custom_call.1} parent=1 // pred_region
      %11 = vsyncadd [#allocation3], 768
      %s12 = sshll.u32 %s0, 4
      %s13 = int_to_ptr.hbm [resolvable:$true] %s12
      %s14 = sshll.u32 [#allocation2], 4
      %s15 = int_to_ptr.vmem [resolvable:$true] %s14
      %20 = dma.hbm_to_vmem [thread:$0]  %s13, 256, %s15, [#allocation3], 256, 256, 16
    $region5: #{tpu_custom_call.1} parent=1 // pred_fallthru
      _
    // Predicated region
    $region6: #{tpu_custom_call.1} parent=1 // pred_check
      _
    $region7: #{tpu_custom_call.1} parent=1 // pred_check_branch
      %22 = sbr.rel (0) target = $region9
    $region8: #{tpu_custom_call.1} parent=1 // pred_region
      %24 = dma.done [#allocation3], 1024
    $region9: #{tpu_custom_call.1} parent=1 // pred_fallthru
      _
    %v25 = vld [vmem:[#allocation2] sm:$0xff]
    %v26 = vld [vmem:[#allocation2 + $0x8] sm:$0xff]
    %v27 = vld [vmem:[#allocation2 + $0x10] sm:$0xff]
    %v28 = vld [vmem:[#allocation2 + $0x18] sm:$0xff]
    %v29 = vld [vmem:[#allocation2 + $0x20] sm:$0xff]
    %v30 = vld [vmem:[#allocation2 + $0x28] sm:$0xff]
    %v31 = vld [vmem:[#allocation2 + $0x30] sm:$0xff]
    %v32 = vld [vmem:[#allocation2 + $0x38] sm:$0xff]
    %v33 = vadd.f32 %v25, 5.0
    %v34 = vadd.f32 %v26, 5.0
    %v35 = vadd.f32 %v27, 5.0
    %v36 = vadd.f32 %v28, 5.0
    %v37 = vadd.f32 %v29, 5.0
    %v38 = vadd.f32 %v30, 5.0
    %v39 = vadd.f32 %v31, 5.0
    %v40 = vadd.f32 %v32, 5.0
    %v41 = vsub.f32 %v33, 2.0
    %v42 = vsub.f32 %v34, 2.0
    %v43 = vsub.f32 %v35, 2.0
    %v44 = vsub.f32 %v36, 2.0
    %v45 = vsub.f32 %v37, 2.0
    %v46 = vsub.f32 %v38, 2.0
    %v47 = vsub.f32 %v39, 2.0
    %v48 = vsub.f32 %v40, 2.0
    %v49 = vmul.f32 %v41, 3.0
    %v50 = vmul.f32 %v42, 3.0
    %v51 = vmul.f32 %v43, 3.0
    %v52 = vmul.f32 %v44, 3.0
    %v53 = vmul.f32 %v45, 3.0
    %v54 = vmul.f32 %v46, 3.0
    %v55 = vmul.f32 %v47, 3.0
    %v56 = vmul.f32 %v48, 3.0
    %v57 = vmul.f32 %v49, 0.25
    %v58 = vmul.f32 %v50, 0.25
    %v59 = vmul.f32 %v51, 0.25
    %v60 = vmul.f32 %v52, 0.25
    %v61 = vmul.f32 %v53, 0.25
    %v62 = vmul.f32 %v54, 0.25
    %v63 = vmul.f32 %v55, 0.25
    %v64 = vmul.f32 %v56, 0.25
    %65 = vst [vmem:[#allocation5] sm:$0xff] %v57
    %66 = vst [vmem:[#allocation5 + $0x8] sm:$0xff] %v58
    %67 = vst [vmem:[#allocation5 + $0x10] sm:$0xff] %v59
    %68 = vst [vmem:[#allocation5 + $0x18] sm:$0xff] %v60
    %69 = vst [vmem:[#allocation5 + $0x20] sm:$0xff] %v61
    %70 = vst [vmem:[#allocation5 + $0x28] sm:$0xff] %v62
    %71 = vst [vmem:[#allocation5 + $0x30] sm:$0xff] %v63
    %72 = vst [vmem:[#allocation5 + $0x38] sm:$0xff] %v64
    // Predicated region
    $region10: #{tpu_custom_call.1} parent=1 // pred_check
      _
    $region11: #{tpu_custom_call.1} parent=1 // pred_check_branch
      %74 = sbr.rel (0) target = $region13
    $region12: #{tpu_custom_call.1} parent=1 // pred_region
      %76 = vsyncadd [#allocation4], 768
      %s77 = sshll.u32 [#allocation5], 4
      %s78 = int_to_ptr.vmem [resolvable:$true] %s77
      %s79 = sshll.u32 %s1, 4
      %s80 = int_to_ptr.hbm [resolvable:$true] %s79
      %85 = dma.vmem_to_hbm [thread:$0]  %s78, 256, %s80, [#allocation4], 256, 256, 16
    $region13: #{tpu_custom_call.1} parent=1 // pred_fallthru
      _
    // Predicated region
    $region14: #{tpu_custom_call.1} parent=1 // pred_check
      _
    $region15: #{tpu_custom_call.1} parent=1 // pred_check_branch
      %87 = sbr.rel (0) target = $region17
    $region16: #{tpu_custom_call.1} parent=1 // pred_region
      %89 = dma.done [#allocation4], 1024
    $region17: #{tpu_custom_call.1} parent=1 // pred_fallthru
      _
    %90 = vsyncpa [#allocation3], 1
    %91 = vsyncpa [#allocation4], 1

</llo_original>
